<compile_context>
chip_gen: v7x
topology: tpu7x:2x2x1
jax: 0.10.0
libtpu: 0.0.40
codegen_flags: <defaults>
</compile_context>

<pallas_src>
import functools

import jax
import jax.numpy as jnp
from jax import lax
from jax.experimental import pallas as pl
from jax.experimental.pallas import tpu as pltpu


P_DROP = 0.5  # F.dropout default
_KEEP_THRESHOLD = min(int(round((1.0 - P_DROP) * 4294967296.0)), 4294967295)
_GOLDEN = 0x9E3779B9
_M1 = 0x7FEB352D
_M2 = 0x846CA68B


def _keep_mask(seed_u32, image_u32, c, hw):
    """Bernoulli(1-p) keep mask from a counter-based hash (lowbias32 finalizer).

    Pure jnp ops, so it lowers on Mosaic, runs under the CPU/interpret
    fallback, and can be replayed bit-exactly in the pure-JAX reference.
    """
    c_idx = lax.broadcasted_iota(jnp.int32, (c, hw), 0)
    h_idx = lax.broadcasted_iota(jnp.int32, (c, hw), 1)
    idx = (c_idx * hw + h_idx).astype(jnp.uint32)
    h = idx + seed_u32 + (image_u32 + jnp.uint32(1)) * jnp.uint32(_GOLDEN)
    h = h ^ (h >> 16)
    h = h * jnp.uint32(_M1)
    h = h ^ (h >> 15)
    h = h * jnp.uint32(_M2)
    h = h ^ (h >> 16)
    return h < jnp.uint32(_KEEP_THRESHOLD)  # single compare -> keep mask


def net_kernel(seed_ref, x_ref, w_ref, b_ref, o_ref, *, training):
    """One image per grid step.

    x_ref: (1, C, HW) f32   channels on sublanes, flattened spatial on lanes
    w_ref: (C, 2)     f32   1x1-conv weight, pre-transposed (tiny)
    b_ref: (1, 2)     f32
    o_ref: (1, 1, 2)  f32   log-probabilities for this image
    """
    x = x_ref[0].astype(jnp.float32)                      # (C, HW)
    c, hw = x.shape

    if training:
        keep = _keep_mask(seed_ref[0].astype(jnp.uint32),
                          pl.program_id(0).astype(jnp.uint32), c, hw)
        x = jnp.where(keep, x, 0.0)                       # mask only, no scale here
        scale = (1.0 / (1.0 - P_DROP)) / hw               # survivor scale folded in once
    else:
        scale = 1.0 / hw

    # AvgPool2d(13) over the full 13x13 extent, commuted in front of the conv:
    # lane (XLU) reduction over HW -> per-channel means (C, 1).
    pooled = jnp.sum(x, axis=1, keepdims=True) * scale    # (C, 1)

    # Conv2d(512, 2, kernel_size=1) collapsed onto the pooled channel vector:
    # (C,2)*(C,1) multiply + sublane reduce; negligible vs. the HW reduction.
    y = jnp.sum(w_ref[...] * pooled, axis=0, keepdims=True) + b_ref[...]  # (1, 2)

    # F.log_softmax on a 4-D tensor defaults to dim=1 (channel dim of size 2).
    m = jnp.max(y, axis=1, keepdims=True)
    z = y - m
    lse = jnp.log(jnp.sum(jnp.exp(z), axis=1, keepdims=True))
    o_ref[0] = (z - lse).astype(o_ref.dtype)


def net_forward(x_nchw, w, b, *, training=True, seed=0):
    """Wrapper: NCHW -> (N, C, H*W) free reshape, batch-parallel pallas_call."""
    N, C, H, W = x_nchw.shape
    HW = H * W
    x_ncs = x_nchw.reshape(N, C, HW)                   # no transpose, no HBM pass
    w_t = jnp.transpose(w.astype(jnp.float32))         # (C, 2), tiny
    b2 = b.reshape(1, 2).astype(jnp.float32)
    seed_arr = jnp.array([seed], dtype=jnp.int32)

    out = pl.pallas_call(
        functools.partial(net_kernel, training=training),
        out_shape=jax.ShapeDtypeStruct((N, 1, 2), jnp.float32),
        grid_spec=pltpu.PrefetchScalarGridSpec(
            num_scalar_prefetch=1,                     # dropout seed -> SMEM
            grid=(N,),
            in_specs=[
                pl.BlockSpec((1, C, HW), lambda n, seed: (n, 0, 0)),
                pl.BlockSpec((C, 2), lambda n, seed: (0, 0)),
                pl.BlockSpec((1, 2), lambda n, seed: (0, 0)),
            ],
            out_specs=pl.BlockSpec((1, 1, 2), lambda n, seed: (n, 0, 0)),
        ),
        compiler_params=pltpu.CompilerParams(
            dimension_semantics=("parallel",)),        # shards batch across TCs on v7x
    )(seed_arr, x_ncs, w_t, b2)
    return out.reshape(N, 2)


def reference_forward_eval(x_nchw, w, b):
    """Pure-JAX eval-mode reference (dropout is identity)."""
    y = jnp.einsum("nchw,oc->nohw", x_nchw, w) + b[None, :, None, None]
    pooled = jnp.mean(y, axis=(2, 3))
    return jax.nn.log_softmax(pooled, axis=1)


def reference_forward_train(x_nchw, w, b, *, seed):
    """Pure-JAX training-mode reference replaying the kernel's dropout mask."""
    N, C, H, W = x_nchw.shape
    HW = H * W
    x = x_nchw.reshape(N, C, HW)
    keep = jnp.stack(
        [_keep_mask(jnp.uint32(seed), jnp.uint32(n), C, HW) for n in range(N)])
    xm = jnp.where(keep, x, 0.0) * (1.0 / (1.0 - P_DROP))
    pooled = jnp.mean(xm, axis=2)                       # (N, C)
    y = pooled @ w.T + b[None, :]
    return jax.nn.log_softmax(y, axis=1)


if __name__ == "__main__":
    key = jax.random.PRNGKey(0)
    kx, kw, kb = jax.random.split(key, 3)

    # Shapes implied by the module: Conv2d(512 -> 2, k=1) then AvgPool2d(13)
    # => input is (N, 512, 13, 13).
    N, C, H, W = 2, 512, 13, 13
    x = jax.random.normal(kx, (N, C, H, W), dtype=jnp.float32)

    # Conv2d(512, 2, 1) params (PyTorch-style uniform(-1/sqrt(fan_in), ...)).
    fan_in = C
    bound = 1.0 / (fan_in ** 0.5)
    w = jax.random.uniform(kw, (2, C), minval=-bound, maxval=bound, dtype=jnp.float32)
    b = jax.random.uniform(kb, (2,), minval=-bound, maxval=bound, dtype=jnp.float32)

    # Eval mode (dropout = identity): check against the pure-JAX reference.
    out_eval = jax.block_until_ready(net_forward(x, w, b, training=False))
    ref_eval = reference_forward_eval(x, w, b)
    assert out_eval.shape == (N, 2), out_eval.shape
    assert jnp.allclose(out_eval, ref_eval, atol=1e-4, rtol=1e-4), (out_eval, ref_eval)

    # Training mode (module default): p=0.5 dropout from the in-kernel hash,
    # checked against a pure-JAX reference that replays the same mask.
    out_train = jax.block_until_ready(net_forward(x, w, b, training=True, seed=0))
    ref_train = reference_forward_train(x, w, b, seed=0)
    assert out_train.shape == (N, 2), out_train.shape
    assert jnp.allclose(out_train, ref_train, atol=1e-4, rtol=1e-4), (out_train, ref_train)
    assert bool(jnp.all(jnp.isfinite(out_train)))
    # log_softmax rows must normalize to 1.
    assert jnp.allclose(jnp.sum(jnp.exp(out_train), axis=1), 1.0, atol=1e-5)

    print("KERNEL_OK")
</pallas_src>

<mosaic_0001>
module attributes {stable_mosaic.version = 11 : i64} {
  func.func @net_kernel(%arg0: i32, %arg1: memref<1xi32, #tpu.memory_space<smem>>, %arg2: memref<1x512x169xf32, #tpu.memory_space<vmem>>, %arg3: memref<512x2xf32, #tpu.memory_space<vmem>>, %arg4: memref<1x2xf32, #tpu.memory_space<vmem>>, %arg5: memref<1x1x2xf32, #tpu.memory_space<vmem>>) attributes {dimension_semantics = [#tpu.dimension_semantics<parallel>], iteration_bounds = array<i64: 2>, scalar_prefetch = 1 : i64, scratch_operands = 0 : i64, tpu.core_type = #tpu.core_type<tc>, window_params = [{transform_indices = @transform_0, window_bounds = array<i64: 1, 512, 169>}, {pipeline_mode = #tpu.pipeline_mode<synchronous>, transform_indices = @transform_1, window_bounds = array<i64: 512, 2>}, {pipeline_mode = #tpu.pipeline_mode<synchronous>, transform_indices = @transform_2, window_bounds = array<i64: 1, 2>}, {transform_indices = @transform_3, window_bounds = array<i64: 1, 1, 2>}]} {
    %c0 = arith.constant 0 : index
    %c0_0 = arith.constant 0 : index
    %c0_1 = arith.constant 0 : index
    %0 = vector.load %arg2[%c0, %c0_0, %c0_1] : memref<1x512x169xf32, #tpu.memory_space<vmem>>, vector<1x512x169xf32>
    %1 = vector.shape_cast %0 : vector<1x512x169xf32> to vector<512x169xf32>
    %cst = arith.constant dense<0.000000e+00> : vector<512xf32>
    %2 = vector.multi_reduction <add>, %1, %cst [1] : vector<512x169xf32> to vector<512xf32>
    %3 = vector.shape_cast %2 : vector<512xf32> to vector<512x1xf32>
    %cst_2 = arith.constant 5.917160e-03 : f32
    %4 = vector.broadcast %cst_2 : f32 to vector<512x1xf32>
    %5 = arith.mulf %3, %4 : vector<512x1xf32>
    %c0_3 = arith.constant 0 : index
    %c0_4 = arith.constant 0 : index
    %6 = vector.load %arg3[%c0_3, %c0_4] : memref<512x2xf32, #tpu.memory_space<vmem>>, vector<512x2xf32>
    %7 = vector.broadcast %5 : vector<512x1xf32> to vector<512x2xf32>
    %8 = arith.mulf %6, %7 : vector<512x2xf32>
    %cst_5 = arith.constant dense<0.000000e+00> : vector<2xf32>
    %9 = vector.multi_reduction <add>, %8, %cst_5 [0] : vector<512x2xf32> to vector<2xf32>
    %10 = vector.shape_cast %9 : vector<2xf32> to vector<1x2xf32>
    %c0_6 = arith.constant 0 : index
    %c0_7 = arith.constant 0 : index
    %11 = vector.load %arg4[%c0_6, %c0_7] : memref<1x2xf32, #tpu.memory_space<vmem>>, vector<1x2xf32>
    %12 = arith.addf %10, %11 : vector<1x2xf32>
    %cst_8 = arith.constant dense<0xFF800000> : vector<1xf32>
    %13 = vector.multi_reduction <maximumf>, %12, %cst_8 [1] : vector<1x2xf32> to vector<1xf32>
    %14 = vector.shape_cast %13 : vector<1xf32> to vector<1x1xf32>
    %15 = vector.broadcast %14 : vector<1x1xf32> to vector<1x2xf32>
    %16 = arith.subf %12, %15 : vector<1x2xf32>
    %17 = math.exp %16 : vector<1x2xf32>
    %cst_9 = arith.constant dense<0.000000e+00> : vector<1xf32>
    %18 = vector.multi_reduction <add>, %17, %cst_9 [1] : vector<1x2xf32> to vector<1xf32>
    %19 = vector.shape_cast %18 : vector<1xf32> to vector<1x1xf32>
    %20 = math.log %19 : vector<1x1xf32>
    %21 = vector.broadcast %20 : vector<1x1xf32> to vector<1x2xf32>
    %22 = arith.subf %16, %21 : vector<1x2xf32>
    %c0_10 = arith.constant 0 : index
    %c0_11 = arith.constant 0 : index
    %c0_12 = arith.constant 0 : index
    %23 = vector.load %arg5[%c0_10, %c0_11, %c0_12] : memref<1x1x2xf32, #tpu.memory_space<vmem>>, vector<1x1x2xf32>
    %24 = vector.shape_cast %23 : vector<1x1x2xf32> to vector<1x2xf32>
    %25 = vector.shape_cast %22 : vector<1x2xf32> to vector<1x1x2xf32>
    tpu.vector_store %arg5[%c0_10, %c0_11, %c0_12], %25 {strides = array<i32>} : memref<1x1x2xf32, #tpu.memory_space<vmem>>, vector<1x1x2xf32>,
    return
  }
  func.func @transform_0(%arg0: i32, %arg1: memref<1xi32, #tpu.memory_space<smem>>) -> (i32, i32, i32) {
    %c0_i32 = arith.constant 0 : i32
    %c0_i32_0 = arith.constant 0 : i32
    %c0_i32_1 = arith.constant 0 : i32
    return %arg0, %c0_i32, %c0_i32_0 : i32, i32, i32
  }
  func.func @transform_1(%arg0: i32, %arg1: memref<1xi32, #tpu.memory_space<smem>>) -> (i32, i32) {
    %c0_i32 = arith.constant 0 : i32
    %c0_i32_0 = arith.constant 0 : i32
    %c0_i32_1 = arith.constant 0 : i32
    return %c0_i32, %c0_i32_0 : i32, i32
  }
  func.func @transform_2(%arg0: i32, %arg1: memref<1xi32, #tpu.memory_space<smem>>) -> (i32, i32) {
    %c0_i32 = arith.constant 0 : i32
    %c0_i32_0 = arith.constant 0 : i32
    %c0_i32_1 = arith.constant 0 : i32
    return %c0_i32, %c0_i32_0 : i32, i32
  }
  func.func @transform_3(%arg0: i32, %arg1: memref<1xi32, #tpu.memory_space<smem>>) -> (i32, i32, i32) {
    %c0_i32 = arith.constant 0 : i32
    %c0_i32_0 = arith.constant 0 : i32
    %c0_i32_1 = arith.constant 0 : i32
    return %arg0, %c0_i32, %c0_i32_0 : i32, i32, i32
  }
}

</mosaic_0001>

<llo_original>
// kernel: tpu_custom_call.1
$region0: #{tpu_custom_call.1}
  #allocation0 [shape = 'u32[]', space=smem, size = 0x4, offset = 0x4, fixed_abs, tag = 'smem constant byte address 0x4 - core index']
  #allocation1 [shape = 'u32[144,128]{1,0:T(1,128)}', space=vmem, size = 0x12000, scoped, tag = 'internal scratch']
  #allocation2 [shape = 's32[1]{0}', space=sflag, size = 0x4, scoped, tag = 'scoped memory for tpu_custom_call.1']
  #allocation3 [shape = 's32[1]{0:T(128)S(6)}', space=smem, size = 0x200, scoped, tag = 'prefetched SMEM operand 0']
  %s0 = inlined_call_operand.<no memory space> [shape: s32[1], index: 0, kind: input, shape index: {}]
  %s1 = inlined_call_operand.vmem [shape: f32[2,512,169], index: 1, kind: input, shape index: {}]
  %s2 = inlined_call_operand.vmem [shape: f32[512,2], index: 2, kind: input, shape index: {}]
  %s3 = inlined_call_operand.vmem [shape: f32[1,2], index: 3, kind: input, shape index: {}]
  %s4 = inlined_call_operand.hbm [shape: f32[2,1,2], index: 4, kind: output, shape index: {}]
  %s5 = sld [smem:[#allocation0]]
  $region45: #{tpu_custom_call.1} parent=0
    _
  %s7 = ssub.s32 1, %s5
  %s8 = scalar_select 0, %s7, %s5
  %9 = sst [smem:[#allocation3]] %s0
  $region1: #{tpu_custom_call.1} parent=0
    #allocation4 [shape = 'u8[1024]{0}', space=vmem, size = 0x400, scoped, tag = 'output window, operand 0']
    #allocation5 [shape = 's32[2]{0}', space=sflag, size = 0x8, scoped, tag = 'scoped memory for tpu_custom_call.1']
    %10 = vsyncpa [#allocation5], 0
    %s11 = scalar_lea.sflag [#allocation5], 1
    %12 = vsyncpa %s11, 0
    loop: start=0, step=1, limit=4
    $region2: #{tpu_custom_call.1} parent=1 // loop_pre_header
      _
    $region3: #{tpu_custom_call.1} parent=1 // loop_header
      %s14 = sphi 0, %s18
      %p15 = scmp.ge.s32.totalorder %s14, 4
      %s24 = sphi 0, %s26
      %s27 = sphi 0, %s24
      %s28 = sphi 0, %s27
      %s44 = sphi 0, %s28
      %s48 = sphi 0, %s48
      %s50 = sphi 0, %s48
      %s51 = sphi 0, %s50
      %s65 = sphi 0, %s51
      %s69 = sphi 0, %s69
      %s71 = sphi 0, %s69
      %s72 = sphi 0, %s71
      %s86 = sphi 0, %s72
      %s92 = sphi 0, %s94
      %s95 = sphi 0, %s92
      %s96 = sphi 0, %s95
      %s112 = sphi 0, %s96
    $region4: #{tpu_custom_call.1} parent=1 // loop_header_branch
      %17 = sbr.rel (%p15) target = $region8
    $region5: #{tpu_custom_call.1} parent=1 // loop_body
      %s19 = ssub.s32 %s14, 1
      %s20 = ssub.s32 %s14, 2
      %s21 = sadd.s32 %s14, 1
      %s22 = ssub.s32 %s14, %s21
      %p23 = scmp.eq.s32.totalorder %s22, 0
      %s25 = sadd.s32 %s24, 1
      %s26 = scalar_select %p23, %s24, %s25
      %p29 = pneg %p23
      %p30 = scmp.eq.s32.totalorder %s14, 1
      %p31 = por %p29, %p30
      %p32 = scmp.ne.s32.totalorder %s24, %s27
      %p33 = scmp.eq.s32.totalorder %s14, 0
      %p34 = por %p32, %p33
      %p35 = scmp.ne.s32.totalorder %s24, %s27
      %p36 = scmp.eq.s32.totalorder %s19, 1
      %p37 = por %p35, %p36
      %p38 = scmp.ne.s32.totalorder %s27, %s28
      %p39 = scmp.eq.s32.totalorder %s19, 0
      %p40 = por %p38, %p39
      %p41 = scmp.ne.s32.totalorder %s27, %s28
      %p42 = scmp.eq.s32.totalorder %s20, 1
      %p43 = por %p41, %p42
      %p45 = scmp.ne.s32.totalorder %s28, %s44
      %p46 = scmp.eq.s32.totalorder %s20, 0
      %p47 = por %p45, %p46
      %s49 = sadd.s32 %s48, 1
      %p52 = scmp.eq.s32.totalorder %s14, 1
      %p53 = scmp.ne.s32.totalorder %s48, %s50
      %p54 = scmp.eq.s32.totalorder %s14, 0
      %p55 = por %p53, %p54
      %p56 = scmp.ne.s32.totalorder %s48, %s50
      %p57 = scmp.eq.s32.totalorder %s19, 1
      %p58 = por %p56, %p57
      %p59 = scmp.ne.s32.totalorder %s50, %s51
      %p60 = scmp.eq.s32.totalorder %s19, 0
      %p61 = por %p59, %p60
      %p62 = scmp.ne.s32.totalorder %s50, %s51
      %p63 = scmp.eq.s32.totalorder %s20, 1
      %p64 = por %p62, %p63
      %p66 = scmp.ne.s32.totalorder %s51, %s65
      %p67 = scmp.eq.s32.totalorder %s20, 0
      %p68 = por %p66, %p67
      %s70 = sadd.s32 %s69, 1
      %p73 = scmp.eq.s32.totalorder %s14, 1
      %p74 = scmp.ne.s32.totalorder %s69, %s71
      %p75 = scmp.eq.s32.totalorder %s14, 0
      %p76 = por %p74, %p75
      %p77 = scmp.ne.s32.totalorder %s69, %s71
      %p78 = scmp.eq.s32.totalorder %s19, 1
      %p79 = por %p77, %p78
      %p80 = scmp.ne.s32.totalorder %s71, %s72
      %p81 = scmp.eq.s32.totalorder %s19, 0
      %p82 = por %p80, %p81
      %p83 = scmp.ne.s32.totalorder %s71, %s72
      %p84 = scmp.eq.s32.totalorder %s20, 1
      %p85 = por %p83, %p84
      %p87 = scmp.ne.s32.totalorder %s72, %s86
      %p88 = scmp.eq.s32.totalorder %s20, 0
      %p89 = por %p87, %p88
      %s90 = ssub.s32 %s14, %s21
      %p91 = scmp.eq.s32.totalorder %s90, 0
      %s93 = sadd.s32 %s92, 1
      %s94 = scalar_select %p91, %s92, %s93
      %p97 = pneg %p91
      %p98 = scmp.eq.s32.totalorder %s14, 1
      %p99 = por %p97, %p98
      %p100 = scmp.ne.s32.totalorder %s92, %s95
      %p101 = scmp.eq.s32.totalorder %s14, 0
      %p102 = por %p100, %p101
      %p103 = scmp.ne.s32.totalorder %s92, %s95
      %p104 = scmp.eq.s32.totalorder %s19, 1
      %p105 = por %p103, %p104
      %p106 = scmp.ne.s32.totalorder %s95, %s96
      %p107 = scmp.eq.s32.totalorder %s19, 0
      %p108 = por %p106, %p107
      %p109 = scmp.ne.s32.totalorder %s95, %s96
      %p110 = scmp.eq.s32.totalorder %s20, 1
      %p111 = por %p109, %p110
      %p113 = scmp.ne.s32.totalorder %s96, %s112
      %p114 = scmp.eq.s32.totalorder %s20, 0
      %p115 = por %p113, %p114
      %p116 = scmp.le.s32.totalorder 1, %s14
      %p117 = scmp.lt.s32.totalorder %s14, 3
      %p118 = pnand %p116, %p117
      %p119 = pneg %p118
      // Predicated region
      $region9: #{tpu_custom_call.1} parent=5 // pred_check
        _
      $region10: #{tpu_custom_call.1} parent=5 // pred_check_branch
        %121 = sbr.rel (%p118) target = $region12
      $region11: #{tpu_custom_call.1} parent=5 // pred_region
        %s122 = ssub.s32 %s14, 1
        // Predicated region
        $region13: #{tpu_custom_call.1} parent=11 // pred_check
          %p123 = pneg %p61
        $region14: #{tpu_custom_call.1} parent=11 // pred_check_branch
          %125 = sbr.rel (%p123) target = $region16
        $region15: #{tpu_custom_call.1} parent=11 // pred_region
          _
        $region16: #{tpu_custom_call.1} parent=11 // pred_fallthru
          _
        // Predicated region
        $region17: #{tpu_custom_call.1} parent=11 // pred_check
          %p126 = pneg %p82
        $region18: #{tpu_custom_call.1} parent=11 // pred_check_branch
          %128 = sbr.rel (%p126) target = $region20
        $region19: #{tpu_custom_call.1} parent=11 // pred_region
          _
        $region20: #{tpu_custom_call.1} parent=11 // pred_fallthru
          _
      $region12: #{tpu_custom_call.1} parent=5 // pred_fallthru
        _
      %p129 = scmp.lt.s32.totalorder %s14, 2
      // Predicated region
      $region21: #{tpu_custom_call.1} parent=5 // pred_check
        %p130 = pneg %p129
      $region22: #{tpu_custom_call.1} parent=5 // pred_check_branch
        %132 = sbr.rel (%p130) target = $region24
      $region23: #{tpu_custom_call.1} parent=5 // pred_region
        // Predicated region
        $region25: #{tpu_custom_call.1} parent=23 // pred_check
          %p133 = pneg %p34
        $region26: #{tpu_custom_call.1} parent=23 // pred_check_branch
          %135 = sbr.rel (%p133) target = $region28
        $region27: #{tpu_custom_call.1} parent=23 // pred_region
          %p136 = scmp.lt.s32.totalorder %s14, 1
          %s137 = scalar_select %p136, %s14, 1
          %s138 = smul.addr %s137, 128
          %s139 = smul.addr %s138, 8
          %s140 = scalar_lea.vmem %s1, %s139
        $region28: #{tpu_custom_call.1} parent=23 // pred_fallthru
          _
      $region24: #{tpu_custom_call.1} parent=5 // pred_fallthru
        _
      %p141 = scmp.le.s32.totalorder 1, %s14
      %p142 = scmp.lt.s32.totalorder %s14, 3
      %p143 = pnand %p141, %p142
      %p144 = pneg %p143
      // Predicated region
      $region29: #{tpu_custom_call.1} parent=5 // pred_check
        _
      $region30: #{tpu_custom_call.1} parent=5 // pred_check_branch
        %146 = sbr.rel (%p143) target = $region32
      $region31: #{tpu_custom_call.1} parent=5 // pred_region
        %s147 = ssub.s32 %s14, 1
        %p148 = scmp.lt.s32.totalorder %s19, 1
        %s149 = scalar_select %p148, %s19, 1
        %s150 = smul.addr %s149, 128
        %s151 = smul.addr %s150, 8
        %s152 = scalar_lea.vmem %s1, %s151
        %p153 = pneg %p40
        %p154 = pneg %p37
        %p155 = pneg %p61
        %p156 = pneg %p58
        %p157 = pneg %p82
        %p158 = pneg %p79
        %p159 = pneg %p108
        %p160 = pneg %p105
        %s161 = sand.u32 %s95, 1
        %s162 = scalar_lea.sflag [#allocation5], %s161
        %s163 = sand.u32 %s95, 1
        %s164 = scalar_lea.vmem [#allocation4], %s163
        %p165 = scmp.lt.s32.totalorder %s19, 1
        %s166 = scalar_select %p165, %s19, 1
        %s167 = smul.addr %s166, 128
        %s168 = smul.addr %s167, 8
        %s169 = scalar_lea.vmem %s1, %s168
        %v170 = vld [vmem:[%s169] sm:$0xff]
        %v171 = vld [vmem:[%s169 + $0x8] sm:$0xff]
        %v172 = vld [vmem:[%s169 + $0x10] sm:$0xff]
        %v173 = vld [vmem:[%s169 + $0x18] sm:$0xff]
        %v174 = vld [vmem:[%s169 + $0x20] sm:$0xff]
        %v175 = vld [vmem:[%s169 + $0x28] sm:$0xff]
        %v176 = vld [vmem:[%s169 + $0x30] sm:$0xff]
        %v177 = vld [vmem:[%s169 + $0x38] sm:$0xff]
        %v178 = vld [vmem:[%s169 + $0x40] sm:$0xff]
        %v179 = vld [vmem:[%s169 + $0x48] sm:$0xff]
        %v180 = vld [vmem:[%s169 + $0x50] sm:$0xff]
        %v181 = vld [vmem:[%s169 + $0x58] sm:$0xff]
        %v182 = vld [vmem:[%s169 + $0x60] sm:$0xff]
        %v183 = vld [vmem:[%s169 + $0x68] sm:$0xff]
        %v184 = vld [vmem:[%s169 + $0x70] sm:$0xff]
        %v185 = vld [vmem:[%s169 + $0x78] sm:$0xff]
        %v186 = vld [vmem:[%s169 + $0x80] sm:$0xff]
        %v187 = vld [vmem:[%s169 + $0x88] sm:$0xff]
        %v188 = vld [vmem:[%s169 + $0x90] sm:$0xff]
        %v189 = vld [vmem:[%s169 + $0x98] sm:$0xff]
        %v190 = vld [vmem:[%s169 + $0xa0] sm:$0xff]
        %v191 = vld [vmem:[%s169 + $0xa8] sm:$0xff]
        %v192 = vld [vmem:[%s169 + $0xb0] sm:$0xff]
        %v193 = vld [vmem:[%s169 + $0xb8] sm:$0xff]
        %v194 = vld [vmem:[%s169 + $0xc0] sm:$0xff]
        %v195 = vld [vmem:[%s169 + $0xc8] sm:$0xff]
        %v196 = vld [vmem:[%s169 + $0xd0] sm:$0xff]
        %v197 = vld [vmem:[%s169 + $0xd8] sm:$0xff]
        %v198 = vld [vmem:[%s169 + $0xe0] sm:$0xff]
        %v199 = vld [vmem:[%s169 + $0xe8] sm:$0xff]
        %v200 = vld [vmem:[%s169 + $0xf0] sm:$0xff]
        %v201 = vld [vmem:[%s169 + $0xf8] sm:$0xff]
        %v202 = vld [vmem:[%s169 + $0x100] sm:$0xff]
        %v203 = vld [vmem:[%s169 + $0x108] sm:$0xff]
        %v204 = vld [vmem:[%s169 + $0x110] sm:$0xff]
        %v205 = vld [vmem:[%s169 + $0x118] sm:$0xff]
        %v206 = vld [vmem:[%s169 + $0x120] sm:$0xff]
        %v207 = vld [vmem:[%s169 + $0x128] sm:$0xff]
        %v208 = vld [vmem:[%s169 + $0x130] sm:$0xff]
        %v209 = vld [vmem:[%s169 + $0x138] sm:$0xff]
        %v210 = vld [vmem:[%s169 + $0x140] sm:$0xff]
        %v211 = vld [vmem:[%s169 + $0x148] sm:$0xff]
        %v212 = vld [vmem:[%s169 + $0x150] sm:$0xff]
        %v213 = vld [vmem:[%s169 + $0x158] sm:$0xff]
        %v214 = vld [vmem:[%s169 + $0x160] sm:$0xff]
        %v215 = vld [vmem:[%s169 + $0x168] sm:$0xff]
        %v216 = vld [vmem:[%s169 + $0x170] sm:$0xff]
        %v217 = vld [vmem:[%s169 + $0x178] sm:$0xff]
        %v218 = vld [vmem:[%s169 + $0x180] sm:$0xff]
        %v219 = vld [vmem:[%s169 + $0x188] sm:$0xff]
        %v220 = vld [vmem:[%s169 + $0x190] sm:$0xff]
        %v221 = vld [vmem:[%s169 + $0x198] sm:$0xff]
        %v222 = vld [vmem:[%s169 + $0x1a0] sm:$0xff]
        %v223 = vld [vmem:[%s169 + $0x1a8] sm:$0xff]
        %v224 = vld [vmem:[%s169 + $0x1b0] sm:$0xff]
        %v225 = vld [vmem:[%s169 + $0x1b8] sm:$0xff]
        %v226 = vld [vmem:[%s169 + $0x1c0] sm:$0xff]
        %v227 = vld [vmem:[%s169 + $0x1c8] sm:$0xff]
        %v228 = vld [vmem:[%s169 + $0x1d0] sm:$0xff]
        %v229 = vld [vmem:[%s169 + $0x1d8] sm:$0xff]
        %v230 = vld [vmem:[%s169 + $0x1e0] sm:$0xff]
        %v231 = vld [vmem:[%s169 + $0x1e8] sm:$0xff]
        %v232 = vld [vmem:[%s169 + $0x1f0] sm:$0xff]
        %v233 = vld [vmem:[%s169 + $0x1f8] sm:$0xff]
        %v234 = vld [vmem:[%s169 + $0x200] sm:$0xff]
        %v235 = vld [vmem:[%s169 + $0x208] sm:$0xff]
        %v236 = vld [vmem:[%s169 + $0x210] sm:$0xff]
        %v237 = vld [vmem:[%s169 + $0x218] sm:$0xff]
        %v238 = vld [vmem:[%s169 + $0x220] sm:$0xff]
        %v239 = vld [vmem:[%s169 + $0x228] sm:$0xff]
        %v240 = vld [vmem:[%s169 + $0x230] sm:$0xff]
        %v241 = vld [vmem:[%s169 + $0x238] sm:$0xff]
        %v242 = vld [vmem:[%s169 + $0x240] sm:$0xff]
        %v243 = vld [vmem:[%s169 + $0x248] sm:$0xff]
        %v244 = vld [vmem:[%s169 + $0x250] sm:$0xff]
        %v245 = vld [vmem:[%s169 + $0x258] sm:$0xff]
        %v246 = vld [vmem:[%s169 + $0x260] sm:$0xff]
        %v247 = vld [vmem:[%s169 + $0x268] sm:$0xff]
        %v248 = vld [vmem:[%s169 + $0x270] sm:$0xff]
        %v249 = vld [vmem:[%s169 + $0x278] sm:$0xff]
        %v250 = vld [vmem:[%s169 + $0x280] sm:$0xff]
        %v251 = vld [vmem:[%s169 + $0x288] sm:$0xff]
        %v252 = vld [vmem:[%s169 + $0x290] sm:$0xff]
        %v253 = vld [vmem:[%s169 + $0x298] sm:$0xff]
        %v254 = vld [vmem:[%s169 + $0x2a0] sm:$0xff]
        %v255 = vld [vmem:[%s169 + $0x2a8] sm:$0xff]
        %v256 = vld [vmem:[%s169 + $0x2b0] sm:$0xff]
        %v257 = vld [vmem:[%s169 + $0x2b8] sm:$0xff]
        %v258 = vld [vmem:[%s169 + $0x2c0] sm:$0xff]
        %v259 = vld [vmem:[%s169 + $0x2c8] sm:$0xff]
        %v260 = vld [vmem:[%s169 + $0x2d0] sm:$0xff]
        %v261 = vld [vmem:[%s169 + $0x2d8] sm:$0xff]
        %v262 = vld [vmem:[%s169 + $0x2e0] sm:$0xff]
        %v263 = vld [vmem:[%s169 + $0x2e8] sm:$0xff]
        %v264 = vld [vmem:[%s169 + $0x2f0] sm:$0xff]
        %v265 = vld [vmem:[%s169 + $0x2f8] sm:$0xff]
        %v266 = vld [vmem:[%s169 + $0x300] sm:$0xff]
        %v267 = vld [vmem:[%s169 + $0x308] sm:$0xff]
        %v268 = vld [vmem:[%s169 + $0x310] sm:$0xff]
        %v269 = vld [vmem:[%s169 + $0x318] sm:$0xff]
        %v270 = vld [vmem:[%s169 + $0x320] sm:$0xff]
        %v271 = vld [vmem:[%s169 + $0x328] sm:$0xff]
        %v272 = vld [vmem:[%s169 + $0x330] sm:$0xff]
        %v273 = vld [vmem:[%s169 + $0x338] sm:$0xff]
        %v274 = vld [vmem:[%s169 + $0x340] sm:$0xff]
        %v275 = vld [vmem:[%s169 + $0x348] sm:$0xff]
        %v276 = vld [vmem:[%s169 + $0x350] sm:$0xff]
        %v277 = vld [vmem:[%s169 + $0x358] sm:$0xff]
        %v278 = vld [vmem:[%s169 + $0x360] sm:$0xff]
        %v279 = vld [vmem:[%s169 + $0x368] sm:$0xff]
        %v280 = vld [vmem:[%s169 + $0x370] sm:$0xff]
        %v281 = vld [vmem:[%s169 + $0x378] sm:$0xff]
        %v282 = vld [vmem:[%s169 + $0x380] sm:$0xff]
        %v283 = vld [vmem:[%s169 + $0x388] sm:$0xff]
        %v284 = vld [vmem:[%s169 + $0x390] sm:$0xff]
        %v285 = vld [vmem:[%s169 + $0x398] sm:$0xff]
        %v286 = vld [vmem:[%s169 + $0x3a0] sm:$0xff]
        %v287 = vld [vmem:[%s169 + $0x3a8] sm:$0xff]
        %v288 = vld [vmem:[%s169 + $0x3b0] sm:$0xff]
        %v289 = vld [vmem:[%s169 + $0x3b8] sm:$0xff]
        %v290 = vld [vmem:[%s169 + $0x3c0] sm:$0xff]
        %v291 = vld [vmem:[%s169 + $0x3c8] sm:$0xff]
        %v292 = vld [vmem:[%s169 + $0x3d0] sm:$0xff]
        %v293 = vld [vmem:[%s169 + $0x3d8] sm:$0xff]
        %v294 = vld [vmem:[%s169 + $0x3e0] sm:$0xff]
        %v295 = vld [vmem:[%s169 + $0x3e8] sm:$0xff]
        %v296 = vld [vmem:[%s169 + $0x3f0] sm:$0xff]
        %v297 = vld [vmem:[%s169 + $0x3f8] sm:$0xff]
        %vm298 = vcmask 334848
        %v299 = vsel %vm298, %v171, 0.0
        %v300 = vadd.f32 %v170, %v299
        %301 = vadd.xlane.f32.xlu0 %v300
        %v302 = vpop.xlane.xlu0 %301
        %v303 = vsel %vm298, %v173, 0.0
        %v304 = vadd.f32 %v172, %v303
        %305 = vadd.xlane.f32.xlu0 %v304
        %v306 = vpop.xlane.xlu0 %305
        %v307 = vsel %vm298, %v175, 0.0
        %v308 = vadd.f32 %v174, %v307
        %309 = vadd.xlane.f32.xlu0 %v308
        %v310 = vpop.xlane.xlu0 %309
        %v311 = vsel %vm298, %v177, 0.0
        %v312 = vadd.f32 %v176, %v311
        %313 = vadd.xlane.f32.xlu0 %v312
        %v314 = vpop.xlane.xlu0 %313
        %v315 = vsel %vm298, %v179, 0.0
        %v316 = vadd.f32 %v178, %v315
        %317 = vadd.xlane.f32.xlu0 %v316
        %v318 = vpop.xlane.xlu0 %317
        %v319 = vsel %vm298, %v181, 0.0
        %v320 = vadd.f32 %v180, %v319
        %321 = vadd.xlane.f32.xlu0 %v320
        %v322 = vpop.xlane.xlu0 %321
        %v323 = vsel %vm298, %v183, 0.0
        %v324 = vadd.f32 %v182, %v323
        %325 = vadd.xlane.f32.xlu0 %v324
        %v326 = vpop.xlane.xlu0 %325
        %v327 = vsel %vm298, %v185, 0.0
        %v328 = vadd.f32 %v184, %v327
        %329 = vadd.xlane.f32.xlu0 %v328
        %v330 = vpop.xlane.xlu0 %329
        %v331 = vsel %vm298, %v187, 0.0
        %v332 = vadd.f32 %v186, %v331
        %333 = vadd.xlane.f32.xlu0 %v332
        %v334 = vpop.xlane.xlu0 %333
        %v335 = vsel %vm298, %v189, 0.0
        %v336 = vadd.f32 %v188, %v335
        %337 = vadd.xlane.f32.xlu0 %v336
        %v338 = vpop.xlane.xlu0 %337
        %v339 = vsel %vm298, %v191, 0.0
        %v340 = vadd.f32 %v190, %v339
        %341 = vadd.xlane.f32.xlu0 %v340
        %v342 = vpop.xlane.xlu0 %341
        %v343 = vsel %vm298, %v193, 0.0
        %v344 = vadd.f32 %v192, %v343
        %345 = vadd.xlane.f32.xlu0 %v344
        %v346 = vpop.xlane.xlu0 %345
        %v347 = vsel %vm298, %v195, 0.0
        %v348 = vadd.f32 %v194, %v347
        %349 = vadd.xlane.f32.xlu0 %v348
        %v350 = vpop.xlane.xlu0 %349
        %v351 = vsel %vm298, %v197, 0.0
        %v352 = vadd.f32 %v196, %v351
        %353 = vadd.xlane.f32.xlu0 %v352
        %v354 = vpop.xlane.xlu0 %353
        %v355 = vsel %vm298, %v199, 0.0
        %v356 = vadd.f32 %v198, %v355
        %357 = vadd.xlane.f32.xlu0 %v356
        %v358 = vpop.xlane.xlu0 %357
        %v359 = vsel %vm298, %v201, 0.0
        %v360 = vadd.f32 %v200, %v359
        %361 = vadd.xlane.f32.xlu0 %v360
        %v362 = vpop.xlane.xlu0 %361
        %v363 = vsel %vm298, %v203, 0.0
        %v364 = vadd.f32 %v202, %v363
        %365 = vadd.xlane.f32.xlu0 %v364
        %v366 = vpop.xlane.xlu0 %365
        %v367 = vsel %vm298, %v205, 0.0
        %v368 = vadd.f32 %v204, %v367
        %369 = vadd.xlane.f32.xlu0 %v368
        %v370 = vpop.xlane.xlu0 %369
        %v371 = vsel %vm298, %v207, 0.0
        %v372 = vadd.f32 %v206, %v371
        %373 = vadd.xlane.f32.xlu0 %v372
        %v374 = vpop.xlane.xlu0 %373
        %v375 = vsel %vm298, %v209, 0.0
        %v376 = vadd.f32 %v208, %v375
        %377 = vadd.xlane.f32.xlu0 %v376
        %v378 = vpop.xlane.xlu0 %377
        %v379 = vsel %vm298, %v211, 0.0
        %v380 = vadd.f32 %v210, %v379
        %381 = vadd.xlane.f32.xlu0 %v380
        %v382 = vpop.xlane.xlu0 %381
        %v383 = vsel %vm298, %v213, 0.0
        %v384 = vadd.f32 %v212, %v383
        %385 = vadd.xlane.f32.xlu0 %v384
        %v386 = vpop.xlane.xlu0 %385
        %v387 = vsel %vm298, %v215, 0.0
        %v388 = vadd.f32 %v214, %v387
        %389 = vadd.xlane.f32.xlu0 %v388
        %v390 = vpop.xlane.xlu0 %389
        %v391 = vsel %vm298, %v217, 0.0
        %v392 = vadd.f32 %v216, %v391
        %393 = vadd.xlane.f32.xlu0 %v392
        %v394 = vpop.xlane.xlu0 %393
        %v395 = vsel %vm298, %v219, 0.0
        %v396 = vadd.f32 %v218, %v395
        %397 = vadd.xlane.f32.xlu0 %v396
        %v398 = vpop.xlane.xlu0 %397
        %v399 = vsel %vm298, %v221, 0.0
        %v400 = vadd.f32 %v220, %v399
        %401 = vadd.xlane.f32.xlu0 %v400
        %v402 = vpop.xlane.xlu0 %401
        %v403 = vsel %vm298, %v223, 0.0
        %v404 = vadd.f32 %v222, %v403
        %405 = vadd.xlane.f32.xlu0 %v404
        %v406 = vpop.xlane.xlu0 %405
        %v407 = vsel %vm298, %v225, 0.0
        %v408 = vadd.f32 %v224, %v407
        %409 = vadd.xlane.f32.xlu0 %v408
        %v410 = vpop.xlane.xlu0 %409
        %v411 = vsel %vm298, %v227, 0.0
        %v412 = vadd.f32 %v226, %v411
        %413 = vadd.xlane.f32.xlu0 %v412
        %v414 = vpop.xlane.xlu0 %413
        %v415 = vsel %vm298, %v229, 0.0
        %v416 = vadd.f32 %v228, %v415
        %417 = vadd.xlane.f32.xlu0 %v416
        %v418 = vpop.xlane.xlu0 %417
        %v419 = vsel %vm298, %v231, 0.0
        %v420 = vadd.f32 %v230, %v419
        %421 = vadd.xlane.f32.xlu0 %v420
        %v422 = vpop.xlane.xlu0 %421
        %v423 = vsel %vm298, %v233, 0.0
        %v424 = vadd.f32 %v232, %v423
        %425 = vadd.xlane.f32.xlu0 %v424
        %v426 = vpop.xlane.xlu0 %425
        %v427 = vsel %vm298, %v235, 0.0
        %v428 = vadd.f32 %v234, %v427
        %429 = vadd.xlane.f32.xlu0 %v428
        %v430 = vpop.xlane.xlu0 %429
        %v431 = vsel %vm298, %v237, 0.0
        %v432 = vadd.f32 %v236, %v431
        %433 = vadd.xlane.f32.xlu0 %v432
        %v434 = vpop.xlane.xlu0 %433
        %v435 = vsel %vm298, %v239, 0.0
        %v436 = vadd.f32 %v238, %v435
        %437 = vadd.xlane.f32.xlu0 %v436
        %v438 = vpop.xlane.xlu0 %437
        %v439 = vsel %vm298, %v241, 0.0
        %v440 = vadd.f32 %v240, %v439
        %441 = vadd.xlane.f32.xlu0 %v440
        %v442 = vpop.xlane.xlu0 %441
        %v443 = vsel %vm298, %v243, 0.0
        %v444 = vadd.f32 %v242, %v443
        %445 = vadd.xlane.f32.xlu0 %v444
        %v446 = vpop.xlane.xlu0 %445
        %v447 = vsel %vm298, %v245, 0.0
        %v448 = vadd.f32 %v244, %v447
        %449 = vadd.xlane.f32.xlu0 %v448
        %v450 = vpop.xlane.xlu0 %449
        %v451 = vsel %vm298, %v247, 0.0
        %v452 = vadd.f32 %v246, %v451
        %453 = vadd.xlane.f32.xlu0 %v452
        %v454 = vpop.xlane.xlu0 %453
        %v455 = vsel %vm298, %v249, 0.0
        %v456 = vadd.f32 %v248, %v455
        %457 = vadd.xlane.f32.xlu0 %v456
        %v458 = vpop.xlane.xlu0 %457
        %v459 = vsel %vm298, %v251, 0.0
        %v460 = vadd.f32 %v250, %v459
        %461 = vadd.xlane.f32.xlu0 %v460
        %v462 = vpop.xlane.xlu0 %461
        %v463 = vsel %vm298, %v253, 0.0
        %v464 = vadd.f32 %v252, %v463
        %465 = vadd.xlane.f32.xlu0 %v464
        %v466 = vpop.xlane.xlu0 %465
        %v467 = vsel %vm298, %v255, 0.0
        %v468 = vadd.f32 %v254, %v467
        %469 = vadd.xlane.f32.xlu0 %v468
        %v470 = vpop.xlane.xlu0 %469
        %v471 = vsel %vm298, %v257, 0.0
        %v472 = vadd.f32 %v256, %v471
        %473 = vadd.xlane.f32.xlu0 %v472
        %v474 = vpop.xlane.xlu0 %473
        %v475 = vsel %vm298, %v259, 0.0
        %v476 = vadd.f32 %v258, %v475
        %477 = vadd.xlane.f32.xlu0 %v476
        %v478 = vpop.xlane.xlu0 %477
        %v479 = vsel %vm298, %v261, 0.0
        %v480 = vadd.f32 %v260, %v479
        %481 = vadd.xlane.f32.xlu0 %v480
        %v482 = vpop.xlane.xlu0 %481
        %v483 = vsel %vm298, %v263, 0.0
        %v484 = vadd.f32 %v262, %v483
        %485 = vadd.xlane.f32.xlu0 %v484
        %v486 = vpop.xlane.xlu0 %485
        %v487 = vsel %vm298, %v265, 0.0
        %v488 = vadd.f32 %v264, %v487
        %489 = vadd.xlane.f32.xlu0 %v488
        %v490 = vpop.xlane.xlu0 %489
        %v491 = vsel %vm298, %v267, 0.0
        %v492 = vadd.f32 %v266, %v491
        %493 = vadd.xlane.f32.xlu0 %v492
        %v494 = vpop.xlane.xlu0 %493
        %v495 = vsel %vm298, %v269, 0.0
        %v496 = vadd.f32 %v268, %v495
        %497 = vadd.xlane.f32.xlu0 %v496
        %v498 = vpop.xlane.xlu0 %497
        %v499 = vsel %vm298, %v271, 0.0
        %v500 = vadd.f32 %v270, %v499
        %501 = vadd.xlane.f32.xlu0 %v500
        %v502 = vpop.xlane.xlu0 %501
        %v503 = vsel %vm298, %v273, 0.0
        %v504 = vadd.f32 %v272, %v503
        %505 = vadd.xlane.f32.xlu0 %v504
        %v506 = vpop.xlane.xlu0 %505
        %v507 = vsel %vm298, %v275, 0.0
        %v508 = vadd.f32 %v274, %v507
        %509 = vadd.xlane.f32.xlu0 %v508
        %v510 = vpop.xlane.xlu0 %509
        %v511 = vsel %vm298, %v277, 0.0
        %v512 = vadd.f32 %v276, %v511
        %513 = vadd.xlane.f32.xlu0 %v512
        %v514 = vpop.xlane.xlu0 %513
        %v515 = vsel %vm298, %v279, 0.0
        %v516 = vadd.f32 %v278, %v515
        %517 = vadd.xlane.f32.xlu0 %v516
        %v518 = vpop.xlane.xlu0 %517
        %v519 = vsel %vm298, %v281, 0.0
        %v520 = vadd.f32 %v280, %v519
        %521 = vadd.xlane.f32.xlu0 %v520
        %v522 = vpop.xlane.xlu0 %521
        %v523 = vsel %vm298, %v283, 0.0
        %v524 = vadd.f32 %v282, %v523
        %525 = vadd.xlane.f32.xlu0 %v524
        %v526 = vpop.xlane.xlu0 %525
        %v527 = vsel %vm298, %v285, 0.0
        %v528 = vadd.f32 %v284, %v527
        %529 = vadd.xlane.f32.xlu0 %v528
        %v530 = vpop.xlane.xlu0 %529
        %v531 = vsel %vm298, %v287, 0.0
        %v532 = vadd.f32 %v286, %v531
        %533 = vadd.xlane.f32.xlu0 %v532
        %v534 = vpop.xlane.xlu0 %533
        %v535 = vsel %vm298, %v289, 0.0
        %v536 = vadd.f32 %v288, %v535
        %537 = vadd.xlane.f32.xlu0 %v536
        %v538 = vpop.xlane.xlu0 %537
        %v539 = vsel %vm298, %v291, 0.0
        %v540 = vadd.f32 %v290, %v539
        %541 = vadd.xlane.f32.xlu0 %v540
        %v542 = vpop.xlane.xlu0 %541
        %v543 = vsel %vm298, %v293, 0.0
        %v544 = vadd.f32 %v292, %v543
        %545 = vadd.xlane.f32.xlu0 %v544
        %v546 = vpop.xlane.xlu0 %545
        %v547 = vsel %vm298, %v295, 0.0
        %v548 = vadd.f32 %v294, %v547
        %549 = vadd.xlane.f32.xlu0 %v548
        %v550 = vpop.xlane.xlu0 %549
        %v551 = vsel %vm298, %v297, 0.0
        %v552 = vadd.f32 %v296, %v551
        %553 = vadd.xlane.f32.xlu0 %v552
        %v554 = vpop.xlane.xlu0 %553
        %v555 = vmul.f32 %v302, 0.00591716
        %v556 = vmul.f32 %v306, 0.00591716
        %v557 = vmul.f32 %v310, 0.00591716
        %v558 = vmul.f32 %v314, 0.00591716
        %v559 = vmul.f32 %v318, 0.00591716
        %v560 = vmul.f32 %v322, 0.00591716
        %v561 = vmul.f32 %v326, 0.00591716
        %v562 = vmul.f32 %v330, 0.00591716
        %v563 = vmul.f32 %v334, 0.00591716
        %v564 = vmul.f32 %v338, 0.00591716
        %v565 = vmul.f32 %v342, 0.00591716
        %v566 = vmul.f32 %v346, 0.00591716
        %v567 = vmul.f32 %v350, 0.00591716
        %v568 = vmul.f32 %v354, 0.00591716
        %v569 = vmul.f32 %v358, 0.00591716
        %v570 = vmul.f32 %v362, 0.00591716
        %v571 = vmul.f32 %v366, 0.00591716
        %v572 = vmul.f32 %v370, 0.00591716
        %v573 = vmul.f32 %v374, 0.00591716
        %v574 = vmul.f32 %v378, 0.00591716
        %v575 = vmul.f32 %v382, 0.00591716
        %v576 = vmul.f32 %v386, 0.00591716
        %v577 = vmul.f32 %v390, 0.00591716
        %v578 = vmul.f32 %v394, 0.00591716
        %v579 = vmul.f32 %v398, 0.00591716
        %v580 = vmul.f32 %v402, 0.00591716
        %v581 = vmul.f32 %v406, 0.00591716
        %v582 = vmul.f32 %v410, 0.00591716
        %v583 = vmul.f32 %v414, 0.00591716
        %v584 = vmul.f32 %v418, 0.00591716
        %v585 = vmul.f32 %v422, 0.00591716
        %v586 = vmul.f32 %v426, 0.00591716
        %v587 = vmul.f32 %v430, 0.00591716
        %v588 = vmul.f32 %v434, 0.00591716
        %v589 = vmul.f32 %v438, 0.00591716
        %v590 = vmul.f32 %v442, 0.00591716
        %v591 = vmul.f32 %v446, 0.00591716
        %v592 = vmul.f32 %v450, 0.00591716
        %v593 = vmul.f32 %v454, 0.00591716
        %v594 = vmul.f32 %v458, 0.00591716
        %v595 = vmul.f32 %v462, 0.00591716
        %v596 = vmul.f32 %v466, 0.00591716
        %v597 = vmul.f32 %v470, 0.00591716
        %v598 = vmul.f32 %v474, 0.00591716
        %v599 = vmul.f32 %v478, 0.00591716
        %v600 = vmul.f32 %v482, 0.00591716
        %v601 = vmul.f32 %v486, 0.00591716
        %v602 = vmul.f32 %v490, 0.00591716
        %v603 = vmul.f32 %v494, 0.00591716
        %v604 = vmul.f32 %v498, 0.00591716
        %v605 = vmul.f32 %v502, 0.00591716
        %v606 = vmul.f32 %v506, 0.00591716
        %v607 = vmul.f32 %v510, 0.00591716
        %v608 = vmul.f32 %v514, 0.00591716
        %v609 = vmul.f32 %v518, 0.00591716
        %v610 = vmul.f32 %v522, 0.00591716
        %v611 = vmul.f32 %v526, 0.00591716
        %v612 = vmul.f32 %v530, 0.00591716
        %v613 = vmul.f32 %v534, 0.00591716
        %v614 = vmul.f32 %v538, 0.00591716
        %v615 = vmul.f32 %v542, 0.00591716
        %v616 = vmul.f32 %v546, 0.00591716
        %v617 = vmul.f32 %v550, 0.00591716
        %v618 = vmul.f32 %v554, 0.00591716
        %v619 = vld [vmem:[%s2] sm:$0xff]
        %v620 = vld [vmem:[%s2 + $0x8] sm:$0xff]
        %v621 = vld [vmem:[%s2 + $0x10] sm:$0xff]
        %v622 = vld [vmem:[%s2 + $0x18] sm:$0xff]
        %v623 = vld [vmem:[%s2 + $0x20] sm:$0xff]
        %v624 = vld [vmem:[%s2 + $0x28] sm:$0xff]
        %v625 = vld [vmem:[%s2 + $0x30] sm:$0xff]
        %v626 = vld [vmem:[%s2 + $0x38] sm:$0xff]
        %v627 = vld [vmem:[%s2 + $0x40] sm:$0xff]
        %v628 = vld [vmem:[%s2 + $0x48] sm:$0xff]
        %v629 = vld [vmem:[%s2 + $0x50] sm:$0xff]
        %v630 = vld [vmem:[%s2 + $0x58] sm:$0xff]
        %v631 = vld [vmem:[%s2 + $0x60] sm:$0xff]
        %v632 = vld [vmem:[%s2 + $0x68] sm:$0xff]
        %v633 = vld [vmem:[%s2 + $0x70] sm:$0xff]
        %v634 = vld [vmem:[%s2 + $0x78] sm:$0xff]
        %v635 = vld [vmem:[%s2 + $0x80] sm:$0xff]
        %v636 = vld [vmem:[%s2 + $0x88] sm:$0xff]
        %v637 = vld [vmem:[%s2 + $0x90] sm:$0xff]
        %v638 = vld [vmem:[%s2 + $0x98] sm:$0xff]
        %v639 = vld [vmem:[%s2 + $0xa0] sm:$0xff]
        %v640 = vld [vmem:[%s2 + $0xa8] sm:$0xff]
        %v641 = vld [vmem:[%s2 + $0xb0] sm:$0xff]
        %v642 = vld [vmem:[%s2 + $0xb8] sm:$0xff]
        %v643 = vld [vmem:[%s2 + $0xc0] sm:$0xff]
        %v644 = vld [vmem:[%s2 + $0xc8] sm:$0xff]
        %v645 = vld [vmem:[%s2 + $0xd0] sm:$0xff]
        %v646 = vld [vmem:[%s2 + $0xd8] sm:$0xff]
        %v647 = vld [vmem:[%s2 + $0xe0] sm:$0xff]
        %v648 = vld [vmem:[%s2 + $0xe8] sm:$0xff]
        %v649 = vld [vmem:[%s2 + $0xf0] sm:$0xff]
        %v650 = vld [vmem:[%s2 + $0xf8] sm:$0xff]
        %v651 = vld [vmem:[%s2 + $0x100] sm:$0xff]
        %v652 = vld [vmem:[%s2 + $0x108] sm:$0xff]
        %v653 = vld [vmem:[%s2 + $0x110] sm:$0xff]
        %v654 = vld [vmem:[%s2 + $0x118] sm:$0xff]
        %v655 = vld [vmem:[%s2 + $0x120] sm:$0xff]
        %v656 = vld [vmem:[%s2 + $0x128] sm:$0xff]
        %v657 = vld [vmem:[%s2 + $0x130] sm:$0xff]
        %v658 = vld [vmem:[%s2 + $0x138] sm:$0xff]
        %v659 = vld [vmem:[%s2 + $0x140] sm:$0xff]
        %v660 = vld [vmem:[%s2 + $0x148] sm:$0xff]
        %v661 = vld [vmem:[%s2 + $0x150] sm:$0xff]
        %v662 = vld [vmem:[%s2 + $0x158] sm:$0xff]
        %v663 = vld [vmem:[%s2 + $0x160] sm:$0xff]
        %v664 = vld [vmem:[%s2 + $0x168] sm:$0xff]
        %v665 = vld [vmem:[%s2 + $0x170] sm:$0xff]
        %v666 = vld [vmem:[%s2 + $0x178] sm:$0xff]
        %v667 = vld [vmem:[%s2 + $0x180] sm:$0xff]
        %v668 = vld [vmem:[%s2 + $0x188] sm:$0xff]
        %v669 = vld [vmem:[%s2 + $0x190] sm:$0xff]
        %v670 = vld [vmem:[%s2 + $0x198] sm:$0xff]
        %v671 = vld [vmem:[%s2 + $0x1a0] sm:$0xff]
        %v672 = vld [vmem:[%s2 + $0x1a8] sm:$0xff]
        %v673 = vld [vmem:[%s2 + $0x1b0] sm:$0xff]
        %v674 = vld [vmem:[%s2 + $0x1b8] sm:$0xff]
        %v675 = vld [vmem:[%s2 + $0x1c0] sm:$0xff]
        %v676 = vld [vmem:[%s2 + $0x1c8] sm:$0xff]
        %v677 = vld [vmem:[%s2 + $0x1d0] sm:$0xff]
        %v678 = vld [vmem:[%s2 + $0x1d8] sm:$0xff]
        %v679 = vld [vmem:[%s2 + $0x1e0] sm:$0xff]
        %v680 = vld [vmem:[%s2 + $0x1e8] sm:$0xff]
        %v681 = vld [vmem:[%s2 + $0x1f0] sm:$0xff]
        %v682 = vld [vmem:[%s2 + $0x1f8] sm:$0xff]
        %v683 = vmul.f32 %v619, %v555
        %v684 = vmul.f32 %v620, %v556
        %v685 = vmul.f32 %v621, %v557
        %v686 = vmul.f32 %v622, %v558
        %v687 = vmul.f32 %v623, %v559
        %v688 = vmul.f32 %v624, %v560
        %v689 = vmul.f32 %v625, %v561
        %v690 = vmul.f32 %v626, %v562
        %v691 = vmul.f32 %v627, %v563
        %v692 = vmul.f32 %v628, %v564
        %v693 = vmul.f32 %v629, %v565
        %v694 = vmul.f32 %v630, %v566
        %v695 = vmul.f32 %v631, %v567
        %v696 = vmul.f32 %v632, %v568
        %v697 = vmul.f32 %v633, %v569
        %v698 = vmul.f32 %v634, %v570
        %v699 = vmul.f32 %v635, %v571
        %v700 = vmul.f32 %v636, %v572
        %v701 = vmul.f32 %v637, %v573
        %v702 = vmul.f32 %v638, %v574
        %v703 = vmul.f32 %v639, %v575
        %v704 = vmul.f32 %v640, %v576
        %v705 = vmul.f32 %v641, %v577
        %v706 = vmul.f32 %v642, %v578
        %v707 = vmul.f32 %v643, %v579
        %v708 = vmul.f32 %v644, %v580
        %v709 = vmul.f32 %v645, %v581
        %v710 = vmul.f32 %v646, %v582
        %v711 = vmul.f32 %v647, %v583
        %v712 = vmul.f32 %v648, %v584
        %v713 = vmul.f32 %v649, %v585
        %v714 = vmul.f32 %v650, %v586
        %v715 = vmul.f32 %v651, %v587
        %v716 = vmul.f32 %v652, %v588
        %v717 = vmul.f32 %v653, %v589
        %v718 = vmul.f32 %v654, %v590
        %v719 = vmul.f32 %v655, %v591
        %v720 = vmul.f32 %v656, %v592
        %v721 = vmul.f32 %v657, %v593
        %v722 = vmul.f32 %v658, %v594
        %v723 = vmul.f32 %v659, %v595
        %v724 = vmul.f32 %v660, %v596
        %v725 = vmul.f32 %v661, %v597
        %v726 = vmul.f32 %v662, %v598
        %v727 = vmul.f32 %v663, %v599
        %v728 = vmul.f32 %v664, %v600
        %v729 = vmul.f32 %v665, %v601
        %v730 = vmul.f32 %v666, %v602
        %v731 = vmul.f32 %v667, %v603
        %v732 = vmul.f32 %v668, %v604
        %v733 = vmul.f32 %v669, %v605
        %v734 = vmul.f32 %v670, %v606
        %v735 = vmul.f32 %v671, %v607
        %v736 = vmul.f32 %v672, %v608
        %v737 = vmul.f32 %v673, %v609
        %v738 = vmul.f32 %v674, %v610
        %v739 = vmul.f32 %v675, %v611
        %v740 = vmul.f32 %v676, %v612
        %v741 = vmul.f32 %v677, %v613
        %v742 = vmul.f32 %v678, %v614
        %v743 = vmul.f32 %v679, %v615
        %v744 = vmul.f32 %v680, %v616
        %v745 = vmul.f32 %v681, %v617
        %v746 = vmul.f32 %v682, %v618
        %vm747 = vcmask 15360
        %v748 = vsel %vm747, %v683, 0.0
        %v749 = vsel %vm747, %v684, 0.0
        %v750 = vadd.f32 %v748, %v749
        %v751 = vsel %vm747, %v685, 0.0
        %v752 = vadd.f32 %v750, %v751
        %v753 = vsel %vm747, %v686, 0.0
        %v754 = vadd.f32 %v752, %v753
        %v755 = vsel %vm747, %v687, 0.0
        %v756 = vadd.f32 %v754, %v755
        %v757 = vsel %vm747, %v688, 0.0
        %v758 = vadd.f32 %v756, %v757
        %v759 = vsel %vm747, %v689, 0.0
        %v760 = vadd.f32 %v758, %v759
        %v761 = vsel %vm747, %v690, 0.0
        %v762 = vadd.f32 %v760, %v761
        %v763 = vsel %vm747, %v691, 0.0
        %v764 = vadd.f32 %v762, %v763
        %v765 = vsel %vm747, %v692, 0.0
        %v766 = vadd.f32 %v764, %v765
        %v767 = vsel %vm747, %v693, 0.0
        %v768 = vadd.f32 %v766, %v767
        %v769 = vsel %vm747, %v694, 0.0
        %v770 = vadd.f32 %v768, %v769
        %v771 = vsel %vm747, %v695, 0.0
        %v772 = vadd.f32 %v770, %v771
        %v773 = vsel %vm747, %v696, 0.0
        %v774 = vadd.f32 %v772, %v773
        %v775 = vsel %vm747, %v697, 0.0
        %v776 = vadd.f32 %v774, %v775
        %v777 = vsel %vm747, %v698, 0.0
        %v778 = vadd.f32 %v776, %v777
        %v779 = vsel %vm747, %v699, 0.0
        %v780 = vadd.f32 %v778, %v779
        %v781 = vsel %vm747, %v700, 0.0
        %v782 = vadd.f32 %v780, %v781
        %v783 = vsel %vm747, %v701, 0.0
        %v784 = vadd.f32 %v782, %v783
        %v785 = vsel %vm747, %v702, 0.0
        %v786 = vadd.f32 %v784, %v785
        %v787 = vsel %vm747, %v703, 0.0
        %v788 = vadd.f32 %v786, %v787
        %v789 = vsel %vm747, %v704, 0.0
        %v790 = vadd.f32 %v788, %v789
        %v791 = vsel %vm747, %v705, 0.0
        %v792 = vadd.f32 %v790, %v791
        %v793 = vsel %vm747, %v706, 0.0
        %v794 = vadd.f32 %v792, %v793
        %v795 = vsel %vm747, %v707, 0.0
        %v796 = vadd.f32 %v794, %v795
        %v797 = vsel %vm747, %v708, 0.0
        %v798 = vadd.f32 %v796, %v797
        %v799 = vsel %vm747, %v709, 0.0
        %v800 = vadd.f32 %v798, %v799
        %v801 = vsel %vm747, %v710, 0.0
        %v802 = vadd.f32 %v800, %v801
        %v803 = vsel %vm747, %v711, 0.0
        %v804 = vadd.f32 %v802, %v803
        %v805 = vsel %vm747, %v712, 0.0
        %v806 = vadd.f32 %v804, %v805
        %v807 = vsel %vm747, %v713, 0.0
        %v808 = vadd.f32 %v806, %v807
        %v809 = vsel %vm747, %v714, 0.0
        %v810 = vadd.f32 %v808, %v809
        %v811 = vsel %vm747, %v715, 0.0
        %v812 = vadd.f32 %v810, %v811
        %v813 = vsel %vm747, %v716, 0.0
        %v814 = vadd.f32 %v812, %v813
        %v815 = vsel %vm747, %v717, 0.0
        %v816 = vadd.f32 %v814, %v815
        %v817 = vsel %vm747, %v718, 0.0
        %v818 = vadd.f32 %v816, %v817
        %v819 = vsel %vm747, %v719, 0.0
        %v820 = vadd.f32 %v818, %v819
        %v821 = vsel %vm747, %v720, 0.0
        %v822 = vadd.f32 %v820, %v821
        %v823 = vsel %vm747, %v721, 0.0
        %v824 = vadd.f32 %v822, %v823
        %v825 = vsel %vm747, %v722, 0.0
        %v826 = vadd.f32 %v824, %v825
        %v827 = vsel %vm747, %v723, 0.0
        %v828 = vadd.f32 %v826, %v827
        %v829 = vsel %vm747, %v724, 0.0
        %v830 = vadd.f32 %v828, %v829
        %v831 = vsel %vm747, %v725, 0.0
        %v832 = vadd.f32 %v830, %v831
        %v833 = vsel %vm747, %v726, 0.0
        %v834 = vadd.f32 %v832, %v833
        %v835 = vsel %vm747, %v727, 0.0
        %v836 = vadd.f32 %v834, %v835
        %v837 = vsel %vm747, %v728, 0.0
        %v838 = vadd.f32 %v836, %v837
        %v839 = vsel %vm747, %v729, 0.0
        %v840 = vadd.f32 %v838, %v839
        %v841 = vsel %vm747, %v730, 0.0
        %v842 = vadd.f32 %v840, %v841
        %v843 = vsel %vm747, %v731, 0.0
        %v844 = vadd.f32 %v842, %v843
        %v845 = vsel %vm747, %v732, 0.0
        %v846 = vadd.f32 %v844, %v845
        %v847 = vsel %vm747, %v733, 0.0
        %v848 = vadd.f32 %v846, %v847
        %v849 = vsel %vm747, %v734, 0.0
        %v850 = vadd.f32 %v848, %v849
        %v851 = vsel %vm747, %v735, 0.0
        %v852 = vadd.f32 %v850, %v851
        %v853 = vsel %vm747, %v736, 0.0
        %v854 = vadd.f32 %v852, %v853
        %v855 = vsel %vm747, %v737, 0.0
        %v856 = vadd.f32 %v854, %v855
        %v857 = vsel %vm747, %v738, 0.0
        %v858 = vadd.f32 %v856, %v857
        %v859 = vsel %vm747, %v739, 0.0
        %v860 = vadd.f32 %v858, %v859
        %v861 = vsel %vm747, %v740, 0.0
        %v862 = vadd.f32 %v860, %v861
        %v863 = vsel %vm747, %v741, 0.0
        %v864 = vadd.f32 %v862, %v863
        %v865 = vsel %vm747, %v742, 0.0
        %v866 = vadd.f32 %v864, %v865
        %v867 = vsel %vm747, %v743, 0.0
        %v868 = vadd.f32 %v866, %v867
        %v869 = vsel %vm747, %v744, 0.0
        %v870 = vadd.f32 %v868, %v869
        %v871 = vsel %vm747, %v745, 0.0
        %v872 = vadd.f32 %v870, %v871
        %v873 = vsel %vm747, %v746, 0.0
        %v874 = vadd.f32 %v872, %v873
        %v875 = vrot.slane %v874, 4
        %v876 = vadd.f32 %v874, %v875
        %v877 = vrot.slane %v876, 2
        %v878 = vadd.f32 %v876, %v877
        %v879 = vrot.slane %v878, 1
        %v880 = vadd.f32 %v878, %v879
        %v881 = vld [vmem:[%s3] sm:$0x1]
        %v882 = vadd.f32 %v880, %v881
        %vm883 = vcmask 8192
        %v884 = vsel %vm883, %v882, -inf
        %885 = vmax.xlane.f32.xlu0 %v884
        %v886 = vpop.xlane.xlu0 %885
        %v887 = vsub.f32 %v882, %v886
        %v888 = vmul.f32 %v887, 1.442695
        %v889 = vpow.pop %v888
        %v890 = vsel %vm883, %v889, 0.0
        %891 = vadd.xlane.f32.xlu0 %v890
        %v892 = vpop.xlane.xlu0 %891
        %v893 = vlog2.pop %v892
        %v894 = vmul.f32 %v893, 0.6931472
        %v895 = vsub.f32 %v887, %v894
        %896 = vst.msk [vmem:[%s164] sm:$0x1] %vm883, %v895
        %s897 = sand.u32 %s95, 1
        %s898 = scalar_lea.sflag [#allocation5], %s897
        %s899 = sand.u32 %s95, 1
        %s900 = scalar_lea.vmem [#allocation4], %s899
        // Predicated region
        $region33: #{tpu_custom_call.1} parent=31 // pred_check
          %p901 = pneg %p105
        $region34: #{tpu_custom_call.1} parent=31 // pred_check_branch
          %903 = sbr.rel (%p901) target = $region36
        $region35: #{tpu_custom_call.1} parent=31 // pred_region
          %s905 = ssub.s32 16, 16
          %906 = vsyncadd %s898, %s905
          %s907 = smul.addr %s19, 16
          %s908 = scalar_lea.hbm %s4, %s907
          %s910 = sshll.u32 %s900, 4
          %s911 = int_to_ptr.vmem [resolvable:$true] %s910
          %913 = dma.vmem_to_hbm [thread:$0]  %s911, 16, %s908, %s898
        $region36: #{tpu_custom_call.1} parent=31 // pred_fallthru
          _
      $region32: #{tpu_custom_call.1} parent=5 // pred_fallthru
        _
      %p914 = scmp.le.s32.totalorder 2, %s14
      // Predicated region
      $region37: #{tpu_custom_call.1} parent=5 // pred_check
        %p915 = pneg %p914
      $region38: #{tpu_custom_call.1} parent=5 // pred_check_branch
        %917 = sbr.rel (%p915) target = $region40
      $region39: #{tpu_custom_call.1} parent=5 // pred_region
        %s918 = ssub.s32 %s14, 2
        // Predicated region
        $region41: #{tpu_custom_call.1} parent=39 // pred_check
          %p919 = pneg %p111
        $region42: #{tpu_custom_call.1} parent=39 // pred_check_branch
          %921 = sbr.rel (%p919) target = $region44
        $region43: #{tpu_custom_call.1} parent=39 // pred_region
          %s922 = sand.u32 %s96, 1
          %s923 = scalar_lea.sflag [#allocation5], %s922
          %s924 = sand.u32 %s96, 1
          %s925 = scalar_lea.vmem [#allocation4], %s924
          %926 = dma.done %s923, 16
        $region44: #{tpu_custom_call.1} parent=39 // pred_fallthru
          _
      $region40: #{tpu_custom_call.1} parent=5 // pred_fallthru
        _
    $region6: #{tpu_custom_call.1} parent=1 // loop_footer
      %s18 = sadd.s32 1, %s14
    $region7: #{tpu_custom_call.1} parent=1 // loop_footer_branch
      %13 = sbr.rel target = $region3
    $region8: #{tpu_custom_call.1} parent=1 // loop_exit
      _
    %927 = vsyncpa [#allocation5], 1
    %s928 = scalar_lea.sflag [#allocation5], 1
    %929 = vsyncpa %s928, 1

</llo_original>
